<compile_context>
chip_gen: v7x
topology: tpu7x:2x2x1
jax: 0.10.0
libtpu: 0.0.40
codegen_flags: <defaults>
</compile_context>

<pallas_src>
import functools

import jax
import jax.numpy as jnp
from jax.experimental import pallas as pl
from jax.experimental.pallas import tpu as pltpu

_VMEM_LIMIT_BYTES = 40 * 1024 * 1024   # safe on v7x (64 MiB physical) and ample on v5e/v6e
_LEAKY_SLOPE = 0.01                    # torch.nn.functional.leaky_relu default (as in the spec)


# --------------------------------- kernels ------------------------------------------------
def gat_project_kernel(apply_elu, num_heads, dout, x_ref, w_ref,
                       z_ref, s_src_ref, s_dst_ref):
    """One lane-dense MXU call per node tile:  zs = elu?(x) @ [W_cat | W@a_src | W@a_dst].

    Outputs (three separate arrays, no XLA slicing passes afterwards):
      z_ref     (tq, H*(Dout+1)) bf16 : per-head [z_h | 1]  (values + MXU row-sum column)
      s_src_ref (tq, H)          f32  : source score term  a_src . z_h
      s_dst_ref (tq, H)          f32  : destination score term a_dst . z_h
    """
    hd = num_heads * dout
    x = x_ref[...]
    if apply_elu:
        # ELU of the previous layer's output, fused here to save one full HBM round trip.
        x = jnp.where(x > 0, x, jnp.expm1(jnp.minimum(x, 0.0)))
    zs = jnp.dot(x, w_ref[...], preferred_element_type=jnp.float32)
    ones = jnp.ones((zs.shape[0], 1), jnp.float32)
    cols = []
    for h in range(num_heads):
        cols.append(zs[:, h * dout:(h + 1) * dout])
        cols.append(ones)                      # sum(p) column for the attention kernel's dot
    z_ref[...] = jnp.concatenate(cols, axis=-1).astype(z_ref.dtype)
    s_src_ref[...] = zs[:, hd:hd + num_heads]
    s_dst_ref[...] = zs[:, hd + num_heads:]


def gat_attention_kernel(num_heads, dout,
                         m_ref, s_dst_ref, s_src_ref, z_ref, adj_ref,
                         out_ref, acc_ref):
    """Masked softmax over incoming edges + weighted sum, tiled (dest-tile, source-tile).

    m_ref:     (TQ, H)           per-(dest, head) score upper bound (precomputed)
    s_dst_ref: (TQ, H)           destination score term
    s_src_ref: (H, TK)           source score term (lane layout)
    z_ref:     (TK, H*(Dout+1))  bf16 per-head [values | 1]
    adj_ref:   (TQ, TK)          int8 0/1 mask; adj[v, u] = 1 iff there is an edge u -> v
    out_ref:   (TQ, H*Dout)      'cat'-merged output, written on the last source tile
    acc_ref:   (TQ, H*(Dout+1))  f32 accumulator: per head [sum_u p*z_u | sum_u p]
    """
    ki = pl.program_id(1)
    dp1 = dout + 1

    @pl.when(ki == 0)
    def _init():
        acc_ref[...] = jnp.zeros(acc_ref.shape, jnp.float32)

    adj_f = adj_ref[...].astype(jnp.float32)        # cast the 0/1 mask once per tile
    s_dst = s_dst_ref[...]                          # (TQ, H)
    s_src = s_src_ref[...]                          # (H, TK)
    m = m_ref[...]                                  # (TQ, H)
    z = z_ref[...]                                  # (TK, H*(Dout+1)) bf16

    cols = []
    for h in range(num_heads):
        # e[v,u] = leaky_relu(a_dst.z_v + a_src.z_u); both terms come from the projection.
        e = s_dst[:, h:h + 1] + s_src[h:h + 1, :]               # (TQ, TK) broadcast outer-sum
        e = jnp.maximum(e, _LEAKY_SLOPE * e)                    # leaky_relu, no select
        # m bounds the score over ALL sources, so e - m <= 0 even for non-edges (no overflow);
        # a single multiply by the 0/1 mask zeroes non-edges (and fully-masked rows).
        p = jnp.exp(e - m[:, h:h + 1]) * adj_f                  # (TQ, TK)
        # One MXU dot per head; the ones column in z makes its last output column sum_u p,
        # so the softmax denominator never touches the XLU.
        cols.append(jnp.dot(p.astype(jnp.bfloat16), z[:, h * dp1:(h + 1) * dp1],
                            preferred_element_type=jnp.float32))  # (TQ, Dout+1)

    acc_ref[...] += jnp.concatenate(cols, axis=-1)

    @pl.when(ki == pl.num_programs(1) - 1)
    def _finalize():
        acc = acc_ref[...]
        outs = []
        for h in range(num_heads):
            num = acc[:, h * dp1:h * dp1 + dout]                 # (TQ, Dout)
            den = acc[:, h * dp1 + dout:(h + 1) * dp1]           # (TQ, 1)
            # The floor only triggers for zero-in-degree rows (num == 0 -> output exactly 0).
            outs.append(num / jnp.maximum(den, 1e-30))
        out_ref[...] = jnp.concatenate(outs, axis=-1).astype(out_ref.dtype)


# --------------------------------- layer wrapper -------------------------------------------
def multi_head_gat_layer(h, w_big, adj_i8, num_heads, dout, *, apply_elu=False,
                         tile_q=None, tile_k=None):
    """One MultiHeadGATLayer (merge='cat') == projection pallas_call + attention pallas_call."""
    n, din = h.shape
    hd = num_heads * dout
    wcols = hd + 2 * num_heads
    assert w_big.shape == (din, wcols)
    assert adj_i8.shape == (n, n)

    # Dest tiles: moderate (128-256) and >= 2 of them whenever possible so v7x's two
    # TensorCores both get work; source tiles: large (up to 1024) to amortize per-step
    # bookkeeping.  int8 adj needs sublane multiples of 32, bf16 z needs 16.
    if tile_q is None:
        tile_q = min(n, max(128, min(256, n // 4)))
        if n % tile_q != 0:
            tile_q = n
    if tile_k is None:
        tile_k = min(n, 1024)
        if n % tile_k != 0:
            tile_k = n
    tq, tk = tile_q, tile_k
    assert n % tq == 0 and n % tk == 0, "pad N to a multiple of the node tiles"
    assert tq % 32 == 0 or tq == n, "int8 adj / bf16 z need tq % 32 == 0 (or tq == N)"
    assert tk % 128 == 0 or tk == n, "lane tiles need tk % 128 == 0 (or tk == N)"

    # ---- projection: z_aug / s_src / s_dst from a single lane-dense MXU matmul ----
    z_aug, s_src_n, s_dst = pl.pallas_call(
        functools.partial(gat_project_kernel, apply_elu, num_heads, dout),
        out_shape=(
            jax.ShapeDtypeStruct((n, num_heads * (dout + 1)), jnp.bfloat16),
            jax.ShapeDtypeStruct((n, num_heads), jnp.float32),
            jax.ShapeDtypeStruct((n, num_heads), jnp.float32),
        ),
        grid=(n // tq,),
        in_specs=[
            pl.BlockSpec((tq, din), lambda i: (i, 0)),
            pl.BlockSpec((din, wcols), lambda i: (0, 0)),
        ],
        out_specs=(
            pl.BlockSpec((tq, num_heads * (dout + 1)), lambda i: (i, 0)),
            pl.BlockSpec((tq, num_heads), lambda i: (i, 0)),
            pl.BlockSpec((tq, num_heads), lambda i: (i, 0)),
        ),
        compiler_params=pltpu.CompilerParams(
            dimension_semantics=("parallel",),
            vmem_limit_bytes=_VMEM_LIMIT_BYTES),
    )(h, w_big)

    # Tiny O(N*H) layout plumbing + the per-(dest, head) upper bound that replaces the online
    # softmax:  m[v,h] = leaky(s_dst[v,h] + max_u s_src[h,u]).
    s_src = s_src_n.T                                      # (H, N) lane layout for the kernel
    m = s_dst + jnp.max(s_src_n, axis=0)[None, :]          # (N, H)
    m = jnp.maximum(m, _LEAKY_SLOPE * m)

    nq, nk = n // tq, n // tk
    adj_spec_kwargs = {}
    if nk >= 3:
        # Deepen only the adj pipeline (the one O(N^2) stream); matters most on v5e HBM BW.
        adj_spec_kwargs["pipeline_mode"] = pl.Buffered(3)

    cost = pl.CostEstimate(
        flops=int(2 * n * n * num_heads * (dout + 1) + 6 * n * n * num_heads),
        transcendentals=int(n * n * num_heads),
        bytes_accessed=int(n * n                                       # adj (int8)
                           + nq * (z_aug.size * 2 + s_src.size * 4)    # per-dest-tile re-reads
                           + (s_dst.size + m.size + n * hd) * 4),
    )
    out = pl.pallas_call(
        functools.partial(gat_attention_kernel, num_heads, dout),
        out_shape=jax.ShapeDtypeStruct((n, hd), jnp.float32),
        grid=(nq, nk),                                                 # reduction (src) axis last
        in_specs=[
            pl.BlockSpec((tq, num_heads), lambda qi, ki: (qi, 0)),                # m (bound)
            pl.BlockSpec((tq, num_heads), lambda qi, ki: (qi, 0)),                # s_dst
            pl.BlockSpec((num_heads, tk), lambda qi, ki: (0, ki)),                # s_src
            pl.BlockSpec((tk, num_heads * (dout + 1)), lambda qi, ki: (ki, 0)),   # z_aug (bf16)
            pl.BlockSpec((tq, tk), lambda qi, ki: (qi, ki), **adj_spec_kwargs),   # adj (int8)
        ],
        out_specs=pl.BlockSpec((tq, hd), lambda qi, ki: (qi, 0)),      # 'cat' layout directly
        scratch_shapes=[
            pltpu.VMEM((tq, num_heads * (dout + 1)), jnp.float32),     # [num | den] per head
        ],
        compiler_params=pltpu.CompilerParams(
            dimension_semantics=("parallel", "arbitrary"),
            vmem_limit_bytes=_VMEM_LIMIT_BYTES),
        cost_estimate=cost,
    )(m, s_dst, s_src, z_aug, adj_i8)
    return out


def gat_forward(h, params, adj, *, tile_q=None, tile_k=None):
    adj_i8 = (adj > 0).astype(jnp.int8)    # 0/1 mask: the only O(N^2) HBM stream, 1 byte/elem
    h1 = multi_head_gat_layer(h, params["w_big1"], adj_i8,
                              params["num_heads"], params["hidden_dim"],
                              apply_elu=False, tile_q=tile_q, tile_k=tile_k)
    # The ELU between the two layers is fused into layer 2's projection kernel.
    return multi_head_gat_layer(h1, params["w_big2"], adj_i8,
                                1, params["out_dim"],
                                apply_elu=True, tile_q=tile_q, tile_k=tile_k)


# --------------------------- parameters (xavier_normal_, relu gain) -------------------------
def xavier_normal(key, out_f, in_f, gain):
    std = gain * (2.0 / (in_f + out_f)) ** 0.5
    return std * jax.random.normal(key, (out_f, in_f), dtype=jnp.float32)


def pack_layer_params(w_heads, a_heads):
    """Fold per-head fc + attention weights into one (Din, H*Dout + 2H) matrix.

    columns [0, H*Dout)           : W of all heads, 'cat' order
    columns [H*Dout, H*Dout+H)    : W_h @ a_src_h  -> per-head source score term
    columns [H*Dout+H, H*Dout+2H) : W_h @ a_dst_h  -> per-head destination score term
    """
    H, din, dout = w_heads.shape
    w_cat = jnp.transpose(w_heads, (1, 0, 2)).reshape(din, H * dout)
    w_src = jnp.stack([w_heads[i] @ a_heads[i, :dout] for i in range(H)], axis=1)
    w_dst = jnp.stack([w_heads[i] @ a_heads[i, dout:] for i in range(H)], axis=1)
    return jnp.concatenate([w_cat, w_src, w_dst], axis=1)


def init_params(key, in_dim, hidden_dim, out_dim, num_heads):
    gain = 2.0 ** 0.5  # nn.init.calculate_gain('relu')
    keys = jax.random.split(key, 2 * num_heads + 2)
    w1, a1 = [], []
    for i in range(num_heads):
        w = xavier_normal(keys[2 * i], hidden_dim, in_dim, gain)          # (hid, in) torch layout
        a = xavier_normal(keys[2 * i + 1], 1, 2 * hidden_dim, gain)       # (1, 2*hid)
        w1.append(w.T)                                                    # store (in, hid)
        a1.append(a[0])
    w1 = jnp.stack(w1)                                                    # (H, in, hid)
    a1 = jnp.stack(a1)                                                    # (H, 2*hid)
    w2 = xavier_normal(keys[-2], out_dim, hidden_dim * num_heads, gain).T[None]  # (1, hid*H, out)
    a2 = xavier_normal(keys[-1], 1, 2 * out_dim, gain)                    # (1, 2*out)
    return {
        "w1": w1, "a1": a1, "w2": w2, "a2": a2,
        "w_big1": pack_layer_params(w1, a1),
        "w_big2": pack_layer_params(w2, a2),
        "num_heads": num_heads, "hidden_dim": hidden_dim, "out_dim": out_dim,
    }


# --------------------------- pure-JAX reference (correctness check) -------------------------
def gat_layer_ref(h, w_heads, a_heads, adj):
    outs = []
    dout = w_heads.shape[2]
    for i in range(w_heads.shape[0]):
        z = h @ w_heads[i]
        s_src = z @ a_heads[i, :dout]
        s_dst = z @ a_heads[i, dout:]
        e = s_dst[:, None] + s_src[None, :]
        e = jnp.where(e > 0, e, _LEAKY_SLOPE * e)
        e = jnp.where(adj > 0, e, -jnp.inf)
        alpha = jax.nn.softmax(e, axis=-1)
        alpha = jnp.where(adj > 0, alpha, 0.0)
        outs.append(alpha @ z)
    return jnp.concatenate(outs, axis=1)


def gat_ref(h, params, adj):
    h1 = gat_layer_ref(h, params["w1"], params["a1"], adj)
    h1 = jnp.where(h1 > 0, h1, jnp.expm1(jnp.minimum(h1, 0.0)))           # elu
    return gat_layer_ref(h1, params["w2"], params["a2"], adj)


if __name__ == "__main__":
    N, in_dim, hidden_dim, out_dim, num_heads = 256, 16, 8, 4, 2

    key = jax.random.PRNGKey(0)
    k_param, k_x = jax.random.split(key)
    params = init_params(k_param, in_dim, hidden_dim, out_dim, num_heads)
    h = jax.random.normal(k_x, (N, in_dim), dtype=jnp.float32)

    # deterministic graph: self-loops + three forward edges per node
    u = jnp.arange(N)
    src = jnp.concatenate([u, u, u, u])
    dst = jnp.concatenate([u, (u + 1) % N, (u + 5) % N, (u + 11) % N])
    adj = jnp.zeros((N, N), jnp.float32).at[dst, src].set(1.0)
    adj = adj.at[7, :].set(0.0)   # node 7 receives no messages: exercises the 0-in-degree guard

    # 128-tiles with N=256 -> (2, 2) attention grid: exercises both the 'parallel' dest axis
    # and the cross-source-tile accumulation path.
    out = jax.block_until_ready(gat_forward(h, params, adj, tile_q=128, tile_k=128))
    ref = gat_ref(h, params, adj)

    assert out.shape == (N, out_dim)
    assert bool(jnp.all(jnp.isfinite(out))), "non-finite output"
    err = float(jnp.max(jnp.abs(out - ref)))
    scale = float(jnp.max(jnp.abs(ref)))
    # p and z feed the MXU in bf16 (f32 accumulation), so compare relative to output scale.
    assert err <= 2e-2 * scale + 1e-3, f"mismatch vs reference: max_err={err:.4g} scale={scale:.4g}"
    assert float(jnp.max(jnp.abs(out[7]))) < 1e-6, "zero-in-degree node must output 0"

    print("KERNEL_OK")
</pallas_src>

<mosaic_0001>
module attributes {stable_mosaic.version = 11 : i64} {
  func.func @gat_project_kernel(%arg0: i32, %arg1: memref<128x16xf32, #tpu.memory_space<vmem>>, %arg2: memref<16x20xf32, #tpu.memory_space<vmem>>, %arg3: memref<128x18xbf16, #tpu.memory_space<vmem>>, %arg4: memref<128x2xf32, #tpu.memory_space<vmem>>, %arg5: memref<128x2xf32, #tpu.memory_space<vmem>>) attributes {dimension_semantics = [#tpu.dimension_semantics<parallel>], iteration_bounds = array<i64: 2>, scalar_prefetch = 0 : i64, scratch_operands = 0 : i64, tpu.core_type = #tpu.core_type<tc>, window_params = [{transform_indices = @transform_0, window_bounds = array<i64: 128, 16>}, {pipeline_mode = #tpu.pipeline_mode<synchronous>, transform_indices = @transform_1, window_bounds = array<i64: 16, 20>}, {transform_indices = @transform_2, window_bounds = array<i64: 128, 18>}, {transform_indices = @transform_3, window_bounds = array<i64: 128, 2>}, {transform_indices = @transform_4, window_bounds = array<i64: 128, 2>}]} {
    %c0 = arith.constant 0 : index
    %c0_0 = arith.constant 0 : index
    %0 = vector.load %arg1[%c0, %c0_0] : memref<128x16xf32, #tpu.memory_space<vmem>>, vector<128x16xf32>
    %c0_1 = arith.constant 0 : index
    %c0_2 = arith.constant 0 : index
    %1 = vector.load %arg2[%c0_1, %c0_2] : memref<16x20xf32, #tpu.memory_space<vmem>>, vector<16x20xf32>
    %cst = arith.constant dense<0.000000e+00> : vector<128x20xf32>
    %2 = tpu.matmul %0, %1, %cst {dimension_numbers = #tpu.dot_dimension_numbers<[1], [0], [0], [1], [0, 0, 1, 1], [], []>} : vector<128x16xf32>, vector<16x20xf32>, vector<128x20xf32> -> vector<128x20xf32>
    %cst_3 = arith.constant 1.000000e+00 : f32
    %3 = vector.broadcast %cst_3 : f32 to vector<128x1xf32>
    %4 = vector.extract_strided_slice %2 {offsets = [0, 0], sizes = [128, 8], strides = [1, 1]} : vector<128x20xf32> to vector<128x8xf32>
    %5 = vector.extract_strided_slice %2 {offsets = [0, 8], sizes = [128, 8], strides = [1, 1]} : vector<128x20xf32> to vector<128x8xf32>
    %6 = tpu.concatenate %4, %3, %5, %3 in 1 : vector<128x8xf32>, vector<128x1xf32>, vector<128x8xf32>, vector<128x1xf32> -> vector<128x18xf32>
    %7 = arith.truncf %6 : vector<128x18xf32> to vector<128x18xbf16>
    %c0_4 = arith.constant 0 : index
    %c0_5 = arith.constant 0 : index
    %8 = vector.load %arg3[%c0_4, %c0_5] : memref<128x18xbf16, #tpu.memory_space<vmem>>, vector<128x18xbf16>
    tpu.vector_store %arg3[%c0_4, %c0_5], %7 {strides = array<i32>} : memref<128x18xbf16, #tpu.memory_space<vmem>>, vector<128x18xbf16>,
    %9 = vector.extract_strided_slice %2 {offsets = [0, 16], sizes = [128, 2], strides = [1, 1]} : vector<128x20xf32> to vector<128x2xf32>
    %c0_6 = arith.constant 0 : index
    %c0_7 = arith.constant 0 : index
    %10 = vector.load %arg4[%c0_6, %c0_7] : memref<128x2xf32, #tpu.memory_space<vmem>>, vector<128x2xf32>
    tpu.vector_store %arg4[%c0_6, %c0_7], %9 {strides = array<i32>} : memref<128x2xf32, #tpu.memory_space<vmem>>, vector<128x2xf32>,
    %11 = vector.extract_strided_slice %2 {offsets = [0, 18], sizes = [128, 2], strides = [1, 1]} : vector<128x20xf32> to vector<128x2xf32>
    %c0_8 = arith.constant 0 : index
    %c0_9 = arith.constant 0 : index
    %12 = vector.load %arg5[%c0_8, %c0_9] : memref<128x2xf32, #tpu.memory_space<vmem>>, vector<128x2xf32>
    tpu.vector_store %arg5[%c0_8, %c0_9], %11 {strides = array<i32>} : memref<128x2xf32, #tpu.memory_space<vmem>>, vector<128x2xf32>,
    return
  }
  func.func @transform_0(%arg0: i32) -> (i32, i32) {
    %c0_i32 = arith.constant 0 : i32
    %c0_i32_0 = arith.constant 0 : i32
    return %arg0, %c0_i32 : i32, i32
  }
  func.func @transform_1(%arg0: i32) -> (i32, i32) {
    %c0_i32 = arith.constant 0 : i32
    %c0_i32_0 = arith.constant 0 : i32
    %c0_i32_1 = arith.constant 0 : i32
    return %c0_i32, %c0_i32_0 : i32, i32
  }
  func.func @transform_2(%arg0: i32) -> (i32, i32) {
    %c0_i32 = arith.constant 0 : i32
    %c0_i32_0 = arith.constant 0 : i32
    return %arg0, %c0_i32 : i32, i32
  }
  func.func @transform_3(%arg0: i32) -> (i32, i32) {
    %c0_i32 = arith.constant 0 : i32
    %c0_i32_0 = arith.constant 0 : i32
    return %arg0, %c0_i32 : i32, i32
  }
  func.func @transform_4(%arg0: i32) -> (i32, i32) {
    %c0_i32 = arith.constant 0 : i32
    %c0_i32_0 = arith.constant 0 : i32
    return %arg0, %c0_i32 : i32, i32
  }
}

</mosaic_0001>

<llo_original>
// kernel: tpu_custom_call.1
$region0: #{tpu_custom_call.1}
  #allocation0 [shape = 'u32[]', space=smem, size = 0x4, offset = 0x4, fixed_abs, tag = 'smem constant byte address 0x4 - core index']
  #allocation1 [shape = 'u32[144,128]{1,0:T(1,128)}', space=vmem, size = 0x12000, scoped, tag = 'internal scratch']
  %s0 = inlined_call_operand.vmem [shape: f32[256,16], index: 0, kind: input, shape index: {}]
  %s1 = inlined_call_operand.vmem [shape: f32[16,20], index: 1, kind: input, shape index: {}]
  %s2 = inlined_call_operand.vmem [shape: bf16[256,18], index: 2, kind: output, shape index: {0}]
  %s3 = inlined_call_operand.vmem [shape: f32[256,2], index: 3, kind: output, shape index: {1}]
  %s4 = inlined_call_operand.vmem [shape: f32[256,2], index: 4, kind: output, shape index: {2}]
  %5 = xla_tuple %s2, %s3, %s4
  %s6 = sld [smem:[#allocation0]]
  $region57: #{tpu_custom_call.1} parent=0
    _
  %s8 = ssub.s32 1, %s6
  %s9 = scalar_select 0, %s8, %s6
  loop: start=0, step=1, limit=4
  $region2: #{tpu_custom_call.1} parent=0 // loop_pre_header
    _
  $region3: #{tpu_custom_call.1} parent=0 // loop_header
    %s11 = sphi 0, %s15
    %p12 = scmp.ge.s32.totalorder %s11, 4
    %s21 = sphi 0, %s23
    %s24 = sphi 0, %s21
    %s25 = sphi 0, %s24
    %s41 = sphi 0, %s25
    %s45 = sphi 0, %s45
    %s47 = sphi 0, %s45
    %s48 = sphi 0, %s47
    %s62 = sphi 0, %s48
    %s68 = sphi 0, %s70
    %s71 = sphi 0, %s68
    %s72 = sphi 0, %s71
    %s88 = sphi 0, %s72
    %s94 = sphi 0, %s96
    %s97 = sphi 0, %s94
    %s98 = sphi 0, %s97
    %s114 = sphi 0, %s98
    %s120 = sphi 0, %s122
    %s123 = sphi 0, %s120
    %s124 = sphi 0, %s123
    %s140 = sphi 0, %s124
  $region4: #{tpu_custom_call.1} parent=0 // loop_header_branch
    %14 = sbr.rel (%p12) target = $region8
  $region5: #{tpu_custom_call.1} parent=0 // loop_body
    %s16 = ssub.s32 %s11, 1
    %s17 = ssub.s32 %s11, 2
    %s18 = sadd.s32 %s11, 1
    %s19 = ssub.s32 %s11, %s18
    %p20 = scmp.eq.s32.totalorder %s19, 0
    %s22 = sadd.s32 %s21, 1
    %s23 = scalar_select %p20, %s21, %s22
    %p26 = pneg %p20
    %p27 = scmp.eq.s32.totalorder %s11, 1
    %p28 = por %p26, %p27
    %p29 = scmp.ne.s32.totalorder %s21, %s24
    %p30 = scmp.eq.s32.totalorder %s11, 0
    %p31 = por %p29, %p30
    %p32 = scmp.ne.s32.totalorder %s21, %s24
    %p33 = scmp.eq.s32.totalorder %s16, 1
    %p34 = por %p32, %p33
    %p35 = scmp.ne.s32.totalorder %s24, %s25
    %p36 = scmp.eq.s32.totalorder %s16, 0
    %p37 = por %p35, %p36
    %p38 = scmp.ne.s32.totalorder %s24, %s25
    %p39 = scmp.eq.s32.totalorder %s17, 1
    %p40 = por %p38, %p39
    %p42 = scmp.ne.s32.totalorder %s25, %s41
    %p43 = scmp.eq.s32.totalorder %s17, 0
    %p44 = por %p42, %p43
    %s46 = sadd.s32 %s45, 1
    %p49 = scmp.eq.s32.totalorder %s11, 1
    %p50 = scmp.ne.s32.totalorder %s45, %s47
    %p51 = scmp.eq.s32.totalorder %s11, 0
    %p52 = por %p50, %p51
    %p53 = scmp.ne.s32.totalorder %s45, %s47
    %p54 = scmp.eq.s32.totalorder %s16, 1
    %p55 = por %p53, %p54
    %p56 = scmp.ne.s32.totalorder %s47, %s48
    %p57 = scmp.eq.s32.totalorder %s16, 0
    %p58 = por %p56, %p57
    %p59 = scmp.ne.s32.totalorder %s47, %s48
    %p60 = scmp.eq.s32.totalorder %s17, 1
    %p61 = por %p59, %p60
    %p63 = scmp.ne.s32.totalorder %s48, %s62
    %p64 = scmp.eq.s32.totalorder %s17, 0
    %p65 = por %p63, %p64
    %s66 = ssub.s32 %s11, %s18
    %p67 = scmp.eq.s32.totalorder %s66, 0
    %s69 = sadd.s32 %s68, 1
    %s70 = scalar_select %p67, %s68, %s69
    %p73 = pneg %p67
    %p74 = scmp.eq.s32.totalorder %s11, 1
    %p75 = por %p73, %p74
    %p76 = scmp.ne.s32.totalorder %s68, %s71
    %p77 = scmp.eq.s32.totalorder %s11, 0
    %p78 = por %p76, %p77
    %p79 = scmp.ne.s32.totalorder %s68, %s71
    %p80 = scmp.eq.s32.totalorder %s16, 1
    %p81 = por %p79, %p80
    %p82 = scmp.ne.s32.totalorder %s71, %s72
    %p83 = scmp.eq.s32.totalorder %s16, 0
    %p84 = por %p82, %p83
    %p85 = scmp.ne.s32.totalorder %s71, %s72
    %p86 = scmp.eq.s32.totalorder %s17, 1
    %p87 = por %p85, %p86
    %p89 = scmp.ne.s32.totalorder %s72, %s88
    %p90 = scmp.eq.s32.totalorder %s17, 0
    %p91 = por %p89, %p90
    %s92 = ssub.s32 %s11, %s18
    %p93 = scmp.eq.s32.totalorder %s92, 0
    %s95 = sadd.s32 %s94, 1
    %s96 = scalar_select %p93, %s94, %s95
    %p99 = pneg %p93
    %p100 = scmp.eq.s32.totalorder %s11, 1
    %p101 = por %p99, %p100
    %p102 = scmp.ne.s32.totalorder %s94, %s97
    %p103 = scmp.eq.s32.totalorder %s11, 0
    %p104 = por %p102, %p103
    %p105 = scmp.ne.s32.totalorder %s94, %s97
    %p106 = scmp.eq.s32.totalorder %s16, 1
    %p107 = por %p105, %p106
    %p108 = scmp.ne.s32.totalorder %s97, %s98
    %p109 = scmp.eq.s32.totalorder %s16, 0
    %p110 = por %p108, %p109
    %p111 = scmp.ne.s32.totalorder %s97, %s98
    %p112 = scmp.eq.s32.totalorder %s17, 1
    %p113 = por %p111, %p112
    %p115 = scmp.ne.s32.totalorder %s98, %s114
    %p116 = scmp.eq.s32.totalorder %s17, 0
    %p117 = por %p115, %p116
    %s118 = ssub.s32 %s11, %s18
    %p119 = scmp.eq.s32.totalorder %s118, 0
    %s121 = sadd.s32 %s120, 1
    %s122 = scalar_select %p119, %s120, %s121
    %p125 = pneg %p119
    %p126 = scmp.eq.s32.totalorder %s11, 1
    %p127 = por %p125, %p126
    %p128 = scmp.ne.s32.totalorder %s120, %s123
    %p129 = scmp.eq.s32.totalorder %s11, 0
    %p130 = por %p128, %p129
    %p131 = scmp.ne.s32.totalorder %s120, %s123
    %p132 = scmp.eq.s32.totalorder %s16, 1
    %p133 = por %p131, %p132
    %p134 = scmp.ne.s32.totalorder %s123, %s124
    %p135 = scmp.eq.s32.totalorder %s16, 0
    %p136 = por %p134, %p135
    %p137 = scmp.ne.s32.totalorder %s123, %s124
    %p138 = scmp.eq.s32.totalorder %s17, 1
    %p139 = por %p137, %p138
    %p141 = scmp.ne.s32.totalorder %s124, %s140
    %p142 = scmp.eq.s32.totalorder %s17, 0
    %p143 = por %p141, %p142
    %p144 = scmp.le.s32.totalorder 1, %s11
    %p145 = scmp.lt.s32.totalorder %s11, 3
    %p146 = pnand %p144, %p145
    %p147 = pneg %p146
    // Predicated region
    $region9: #{tpu_custom_call.1} parent=5 // pred_check
      _
    $region10: #{tpu_custom_call.1} parent=5 // pred_check_branch
      %149 = sbr.rel (%p146) target = $region12
    $region11: #{tpu_custom_call.1} parent=5 // pred_region
      %s150 = ssub.s32 %s11, 1
      // Predicated region
      $region13: #{tpu_custom_call.1} parent=11 // pred_check
        %p151 = pneg %p58
      $region14: #{tpu_custom_call.1} parent=11 // pred_check_branch
        %153 = sbr.rel (%p151) target = $region16
      $region15: #{tpu_custom_call.1} parent=11 // pred_region
        _
      $region16: #{tpu_custom_call.1} parent=11 // pred_fallthru
        _
    $region12: #{tpu_custom_call.1} parent=5 // pred_fallthru
      _
    %p154 = scmp.lt.s32.totalorder %s11, 2
    // Predicated region
    $region17: #{tpu_custom_call.1} parent=5 // pred_check
      %p155 = pneg %p154
    $region18: #{tpu_custom_call.1} parent=5 // pred_check_branch
      %157 = sbr.rel (%p155) target = $region20
    $region19: #{tpu_custom_call.1} parent=5 // pred_region
      // Predicated region
      $region21: #{tpu_custom_call.1} parent=19 // pred_check
        %p158 = pneg %p31
      $region22: #{tpu_custom_call.1} parent=19 // pred_check_branch
        %160 = sbr.rel (%p158) target = $region24
      $region23: #{tpu_custom_call.1} parent=19 // pred_region
        %s161 = smul.u32 16, %s11
        %p162 = scmp.lt.s32.totalorder %s161, 31
        %s163 = scalar_select %p162, %s161, 31
        %s164 = smul.addr %s163, 8
        %s165 = scalar_lea.vmem %s0, %s164
        %s166 = smul.u32 16, %s11
      $region24: #{tpu_custom_call.1} parent=19 // pred_fallthru
        _
    $region20: #{tpu_custom_call.1} parent=5 // pred_fallthru
      _
    %p167 = scmp.le.s32.totalorder 1, %s11
    %p168 = scmp.lt.s32.totalorder %s11, 3
    %p169 = pnand %p167, %p168
    %p170 = pneg %p169
    // Predicated region
    $region25: #{tpu_custom_call.1} parent=5 // pred_check
      _
    $region26: #{tpu_custom_call.1} parent=5 // pred_check_branch
      %172 = sbr.rel (%p169) target = $region28
    $region27: #{tpu_custom_call.1} parent=5 // pred_region
      %s173 = ssub.s32 %s11, 1
      %s174 = smul.u32 16, %s16
      %p175 = scmp.lt.s32.totalorder %s174, 31
      %s176 = scalar_select %p175, %s174, 31
      %s177 = smul.addr %s176, 8
      %s178 = scalar_lea.vmem %s0, %s177
      %p179 = pneg %p37
      %p180 = pneg %p34
      %p181 = pneg %p58
      %p182 = pneg %p55
      %p183 = pneg %p84
      %p184 = pneg %p81
      %s185 = smul.u32 16, %s16
      %p186 = scmp.lt.s32.totalorder %s185, 31
      %s187 = scalar_select %p186, %s185, 31
      %s188 = smul.addr %s187, 4
      %s189 = scalar_lea.vmem %s2, %s188
      %p190 = pneg %p110
      %p191 = pneg %p107
      %s192 = smul.u32 16, %s16
      %p193 = scmp.lt.s32.totalorder %s192, 31
      %s194 = scalar_select %p193, %s192, 31
      %s195 = smul.addr %s194, 8
      %s196 = scalar_lea.vmem %s3, %s195
      %p197 = pneg %p136
      %p198 = pneg %p133
      %s199 = smul.u32 16, %s16
      %p200 = scmp.lt.s32.totalorder %s199, 31
      %s201 = scalar_select %p200, %s199, 31
      %s202 = smul.addr %s201, 8
      %s203 = scalar_lea.vmem %s4, %s202
      %s204 = smul.u32 16, %s16
      %p205 = scmp.lt.s32.totalorder %s204, 31
      %s206 = scalar_select %p205, %s204, 31
      %s207 = smul.addr %s206, 8
      %s208 = scalar_lea.vmem %s0, %s207
      %s209 = smul.u32 16, %s16
      %s210 = smul.u32 16, %s16
      %p211 = scmp.lt.s32.totalorder %s210, 31
      %s212 = scalar_select %p211, %s210, 31
      %s213 = smul.addr %s212, 4
      %s214 = scalar_lea.vmem %s2, %s213
      %s215 = smul.u32 16, %s16
      %s216 = smul.u32 16, %s16
      %p217 = scmp.lt.s32.totalorder %s216, 31
      %s218 = scalar_select %p217, %s216, 31
      %s219 = smul.addr %s218, 8
      %s220 = scalar_lea.vmem %s3, %s219
      %s221 = smul.u32 16, %s16
      %s222 = smul.u32 16, %s16
      %p223 = scmp.lt.s32.totalorder %s222, 31
      %s224 = scalar_select %p223, %s222, 31
      %s225 = smul.addr %s224, 8
      %s226 = scalar_lea.vmem %s4, %s225
      %s227 = smul.u32 16, %s16
      %v228 = vld [vmem:[%s208] sm:$0xff]
      %v229 = vld [vmem:[%s208 + $0x8] sm:$0xff]
      %v230 = vld [vmem:[%s208 + $0x10] sm:$0xff]
      %v231 = vld [vmem:[%s208 + $0x18] sm:$0xff]
      %v232 = vld [vmem:[%s208 + $0x20] sm:$0xff]
      %v233 = vld [vmem:[%s208 + $0x28] sm:$0xff]
      %v234 = vld [vmem:[%s208 + $0x30] sm:$0xff]
      %v235 = vld [vmem:[%s208 + $0x38] sm:$0xff]
      %v236 = vld [vmem:[%s208 + $0x40] sm:$0xff]
      %v237 = vld [vmem:[%s208 + $0x48] sm:$0xff]
      %v238 = vld [vmem:[%s208 + $0x50] sm:$0xff]
      %v239 = vld [vmem:[%s208 + $0x58] sm:$0xff]
      %v240 = vld [vmem:[%s208 + $0x60] sm:$0xff]
      %v241 = vld [vmem:[%s208 + $0x68] sm:$0xff]
      %v242 = vld [vmem:[%s208 + $0x70] sm:$0xff]
      %v243 = vld [vmem:[%s208 + $0x78] sm:$0xff]
      %v244 = vld [vmem:[%s1] sm:$0xff]
      %v245 = vld [vmem:[%s1 + $0x8] sm:$0xff]
      %vm246 = vcmask 130048
      %v248 = vsel %vm246, %v228, 0
      %v251 = vsel %vm246, %v229, 0
      %v254 = vsel %vm246, %v230, 0
      %v257 = vsel %vm246, %v231, 0
      %v260 = vsel %vm246, %v232, 0
      %v263 = vsel %vm246, %v233, 0
      %v266 = vsel %vm246, %v234, 0
      %v269 = vsel %vm246, %v235, 0
      %v272 = vsel %vm246, %v236, 0
      %v275 = vsel %vm246, %v237, 0
      %v278 = vsel %vm246, %v238, 0
      %v281 = vsel %vm246, %v239, 0
      %v284 = vsel %vm246, %v240, 0
      %v287 = vsel %vm246, %v241, 0
      %v290 = vsel %vm246, %v242, 0
      %v293 = vsel %vm246, %v243, 0
      %295 = vmatprep.subr.mxu0 0.0
      %296 = vmatpush1.msra.mxu0 %v244
      %297 = vmatprep.subr.mxu0 0.0
      %298 = vmatpush1.msra.mxu0 %v245
      %299 = vmatprep.subr.mxu0 0.0
      %300 = vmatpush1.msra.mxu0 0.0
      %301 = vmatprep.subr.mxu0 0.0
      %302 = vmatpush1.msra.mxu0 0.0
      %303 = vmatprep.subr.mxu0 0.0
      %304 = vmatpush1.msra.mxu0 0.0
      %305 = vmatprep.subr.mxu0 0.0
      %306 = vmatpush1.msra.mxu0 0.0
      %307 = vmatprep.subr.mxu0 0.0
      %308 = vmatpush1.msra.mxu0 0.0
      %309 = vmatprep.subr.mxu0 0.0
      %310 = vmatpush1.msra.mxu0 0.0
      %311 = vmatprep.subr.mxu0 0.0
      %312 = vmatpush1.msra.mxu0 0.0
      %313 = vmatprep.subr.mxu0 0.0
      %314 = vmatpush1.msra.mxu0 0.0
      %315 = vmatprep.subr.mxu0 0.0
      %316 = vmatpush1.msra.mxu0 0.0
      %317 = vmatprep.subr.mxu0 0.0
      %318 = vmatpush1.msra.mxu0 0.0
      %319 = vmatprep.subr.mxu0 0.0
      %320 = vmatpush1.msra.mxu0 0.0
      %321 = vmatprep.subr.mxu0 0.0
      %322 = vmatpush1.msra.mxu0 0.0
      %323 = vmatprep.subr.mxu0 0.0
      %324 = vmatpush1.msra.mxu0 0.0
      %325 = vmatprep.subr.mxu0 0.0
      %326 = vmatpush1.msra.mxu0 0.0
      %327 = vmatprep.subr.mxu0 0.0
      %328 = vmatpush1.msra.mxu0 0.0
      %329 = vmatprep.subr.mxu0 0.0
      %330 = vmatpush1.msra.mxu0 0.0
      %331 = vmatprep.subr.mxu0 0.0
      %332 = vmatpush1.msra.mxu0 0.0
      %333 = vmatprep.subr.mxu0 0.0
      %334 = vmatpush1.msra.mxu0 0.0
      %335 = vmatprep.subr.mxu0 0.0
      %336 = vmatpush1.msra.mxu0 0.0
      %337 = vmatprep.subr.mxu0 0.0
      %338 = vmatpush1.msra.mxu0 0.0
      %339 = vmatprep.subr.mxu0 0.0
      %340 = vmatpush1.msra.mxu0 0.0
      %341 = vmatprep.subr.mxu0 0.0
      %342 = vmatpush1.msra.mxu0 0.0
      %343 = vmatprep.subr.mxu0 0.0
      %344 = vmatpush1.msra.mxu0 0.0
      %345 = vmatprep.subr.mxu0 0.0
      %346 = vmatpush1.msra.mxu0 0.0
      %347 = vmatprep.subr.mxu0 0.0
      %348 = vmatpush1.msra.mxu0 0.0
      %349 = vmatprep.subr.mxu0 0.0
      %350 = vmatpush1.msra.mxu0 0.0
      %351 = vmatprep.subr.mxu0 0.0
      %352 = vmatpush1.msra.mxu0 0.0
      %353 = vmatprep.subr.mxu0 0.0
      %354 = vmatpush1.msra.mxu0 0.0
      %355 = vmatprep.subr.mxu0 0.0
      %356 = vmatpush1.msra.mxu0 0.0
      %357 = vmatprep.subr.mxu0 0.0
      %358 = vmatpush1.msra.mxu0 0.0
      %359 = vmatprep.mubr.f32.mxu0 0.0
      %360 = vmatmul.mubr.f32.gmra.mrb[0].mxu0 %v248
      %v361 = vpop.f32.mrb[0].mxu0
      %v362 = vadd.f32 0.0, %v361
      %v363 = vpop.f32.mrb[0].mxu0
      %364 = vmatprep.mubr.f32.mxu0 0.0
      %365 = vmatmul.mubr.f32.gmra.mrb[0].mxu0 %v251
      %v366 = vpop.f32.mrb[0].mxu0
      %v367 = vadd.f32 0.0, %v366
      %v368 = vpop.f32.mrb[0].mxu0
      %369 = vmatprep.mubr.f32.mxu0 0.0
      %370 = vmatmul.mubr.f32.gmra.mrb[0].mxu0 %v254
      %v371 = vpop.f32.mrb[0].mxu0
      %v372 = vadd.f32 0.0, %v371
      %v373 = vpop.f32.mrb[0].mxu0
      %374 = vmatprep.mubr.f32.mxu0 0.0
      %375 = vmatmul.mubr.f32.gmra.mrb[0].mxu0 %v257
      %v376 = vpop.f32.mrb[0].mxu0
      %v377 = vadd.f32 0.0, %v376
      %v378 = vpop.f32.mrb[0].mxu0
      %379 = vmatprep.mubr.f32.mxu0 0.0
      %380 = vmatmul.mubr.f32.gmra.mrb[0].mxu0 %v260
      %v381 = vpop.f32.mrb[0].mxu0
      %v382 = vadd.f32 0.0, %v381
      %v383 = vpop.f32.mrb[0].mxu0
      %384 = vmatprep.mubr.f32.mxu0 0.0
      %385 = vmatmul.mubr.f32.gmra.mrb[0].mxu0 %v263
      %v386 = vpop.f32.mrb[0].mxu0
      %v387 = vadd.f32 0.0, %v386
      %v388 = vpop.f32.mrb[0].mxu0
      %389 = vmatprep.mubr.f32.mxu0 0.0
      %390 = vmatmul.mubr.f32.gmra.mrb[0].mxu0 %v266
      %v391 = vpop.f32.mrb[0].mxu0
      %v392 = vadd.f32 0.0, %v391
      %v393 = vpop.f32.mrb[0].mxu0
      %394 = vmatprep.mubr.f32.mxu0 0.0
      %395 = vmatmul.mubr.f32.gmra.mrb[0].mxu0 %v269
      %v396 = vpop.f32.mrb[0].mxu0
      %v397 = vadd.f32 0.0, %v396
      %v398 = vpop.f32.mrb[0].mxu0
      %399 = vmatprep.mubr.f32.mxu0 0.0
      %400 = vmatmul.mubr.f32.gmra.mrb[0].mxu0 %v272
      %v401 = vpop.f32.mrb[0].mxu0
      %v402 = vadd.f32 0.0, %v401
      %v403 = vpop.f32.mrb[0].mxu0
      %404 = vmatprep.mubr.f32.mxu0 0.0
      %405 = vmatmul.mubr.f32.gmra.mrb[0].mxu0 %v275
      %v406 = vpop.f32.mrb[0].mxu0
      %v407 = vadd.f32 0.0, %v406
      %v408 = vpop.f32.mrb[0].mxu0
      %409 = vmatprep.mubr.f32.mxu0 0.0
      %410 = vmatmul.mubr.f32.gmra.mrb[0].mxu0 %v278
      %v411 = vpop.f32.mrb[0].mxu0
      %v412 = vadd.f32 0.0, %v411
      %v413 = vpop.f32.mrb[0].mxu0
      %414 = vmatprep.mubr.f32.mxu0 0.0
      %415 = vmatmul.mubr.f32.gmra.mrb[0].mxu0 %v281
      %v416 = vpop.f32.mrb[0].mxu0
      %v417 = vadd.f32 0.0, %v416
      %v418 = vpop.f32.mrb[0].mxu0
      %419 = vmatprep.mubr.f32.mxu0 0.0
      %420 = vmatmul.mubr.f32.gmra.mrb[0].mxu0 %v284
      %v421 = vpop.f32.mrb[0].mxu0
      %v422 = vadd.f32 0.0, %v421
      %v423 = vpop.f32.mrb[0].mxu0
      %424 = vmatprep.mubr.f32.mxu0 0.0
      %425 = vmatmul.mubr.f32.gmra.mrb[0].mxu0 %v287
      %v426 = vpop.f32.mrb[0].mxu0
      %v427 = vadd.f32 0.0, %v426
      %v428 = vpop.f32.mrb[0].mxu0
      %429 = vmatprep.mubr.f32.mxu0 0.0
      %430 = vmatmul.mubr.f32.gmra.mrb[0].mxu0 %v290
      %v431 = vpop.f32.mrb[0].mxu0
      %v432 = vadd.f32 0.0, %v431
      %v433 = vpop.f32.mrb[0].mxu0
      %434 = vmatprep.mubr.f32.mxu0 0.0
      %435 = vmatmul.mubr.f32.gmra.mrb[0].mxu0 %v293
      %v436 = vpop.f32.mrb[0].mxu0
      %v437 = vadd.f32 0.0, %v436
      %v438 = vpop.f32.mrb[0].mxu0
      %439 = vdwg.mxu0
      %456 = vrot.lane.b32.xlu0 %v362, 1
      %v457 = vpop.permute.xlu0 %456
      %458 = vrot.lane.b32.xlu0 %v367, 1
      %v459 = vpop.permute.xlu0 %458
      %460 = vrot.lane.b32.xlu0 %v372, 1
      %v461 = vpop.permute.xlu0 %460
      %462 = vrot.lane.b32.xlu0 %v377, 1
      %v463 = vpop.permute.xlu0 %462
      %464 = vrot.lane.b32.xlu0 %v382, 1
      %v465 = vpop.permute.xlu0 %464
      %466 = vrot.lane.b32.xlu0 %v387, 1
      %v467 = vpop.permute.xlu0 %466
      %468 = vrot.lane.b32.xlu0 %v392, 1
      %v469 = vpop.permute.xlu0 %468
      %470 = vrot.lane.b32.xlu0 %v397, 1
      %v471 = vpop.permute.xlu0 %470
      %472 = vrot.lane.b32.xlu0 %v402, 1
      %v473 = vpop.permute.xlu0 %472
      %474 = vrot.lane.b32.xlu0 %v407, 1
      %v475 = vpop.permute.xlu0 %474
      %476 = vrot.lane.b32.xlu0 %v412, 1
      %v477 = vpop.permute.xlu0 %476
      %478 = vrot.lane.b32.xlu0 %v417, 1
      %v479 = vpop.permute.xlu0 %478
      %480 = vrot.lane.b32.xlu0 %v422, 1
      %v481 = vpop.permute.xlu0 %480
      %482 = vrot.lane.b32.xlu0 %v427, 1
      %v483 = vpop.permute.xlu0 %482
      %484 = vrot.lane.b32.xlu0 %v432, 1
      %v485 = vpop.permute.xlu0 %484
      %486 = vrot.lane.b32.xlu0 %v437, 1
      %v487 = vpop.permute.xlu0 %486
      %vm504 = vcmask 64512
      %v505 = vsel %vm504, %v362, 1.0
      %v506 = vsel %vm504, %v367, 1.0
      %v507 = vsel %vm504, %v372, 1.0
      %v508 = vsel %vm504, %v377, 1.0
      %v509 = vsel %vm504, %v382, 1.0
      %v510 = vsel %vm504, %v387, 1.0
      %v511 = vsel %vm504, %v392, 1.0
      %v512 = vsel %vm504, %v397, 1.0
      %v513 = vsel %vm504, %v402, 1.0
      %v514 = vsel %vm504, %v407, 1.0
      %v515 = vsel %vm504, %v412, 1.0
      %v516 = vsel %vm504, %v417, 1.0
      %v517 = vsel %vm504, %v422, 1.0
      %v518 = vsel %vm504, %v427, 1.0
      %v519 = vsel %vm504, %v432, 1.0
      %v520 = vsel %vm504, %v437, 1.0
      %vm521 = vcmask 72704
      %v522 = vsel %vm521, %v505, %v457
      %v523 = vsel %vm521, %v506, %v459
      %v524 = vsel %vm521, %v507, %v461
      %v525 = vsel %vm521, %v508, %v463
      %v526 = vsel %vm521, %v509, %v465
      %v527 = vsel %vm521, %v510, %v467
      %v528 = vsel %vm521, %v511, %v469
      %v529 = vsel %vm521, %v512, %v471
      %v530 = vsel %vm521, %v513, %v473
      %v531 = vsel %vm521, %v514, %v475
      %v532 = vsel %vm521, %v515, %v477
      %v533 = vsel %vm521, %v516, %v479
      %v534 = vsel %vm521, %v517, %v481
      %v535 = vsel %vm521, %v518, %v483
      %v536 = vsel %vm521, %v519, %v485
      %v537 = vsel %vm521, %v520, %v487
      %vm538 = vcmask 138240
      %v539 = vsel %vm538, %v522, 1.0
      %v540 = vsel %vm538, %v523, 1.0
      %v541 = vsel %vm538, %v524, 1.0
      %v542 = vsel %vm538, %v525, 1.0
      %v543 = vsel %vm538, %v526, 1.0
      %v544 = vsel %vm538, %v527, 1.0
      %v545 = vsel %vm538, %v528, 1.0
      %v546 = vsel %vm538, %v529, 1.0
      %v547 = vsel %vm538, %v530, 1.0
      %v548 = vsel %vm538, %v531, 1.0
      %v549 = vsel %vm538, %v532, 1.0
      %v550 = vsel %vm538, %v533, 1.0
      %v551 = vsel %vm538, %v534, 1.0
      %v552 = vsel %vm538, %v535, 1.0
      %v553 = vsel %vm538, %v536, 1.0
      %v554 = vsel %vm538, %v537, 1.0
      %v555 = vpack.c.bf16 %v540, %v539
      %v556 = vpack.c.bf16 %v542, %v541
      %v557 = vpack.c.bf16 %v544, %v543
      %v558 = vpack.c.bf16 %v546, %v545
      %v559 = vpack.c.bf16 %v548, %v547
      %v560 = vpack.c.bf16 %v550, %v549
      %v561 = vpack.c.bf16 %v552, %v551
      %v562 = vpack.c.bf16 %v554, %v553
      %v571 = vunpack.c.l.b16 %v555
      %v572 = vunpack.c.h.b16 %v555
      %v573 = vunpack.c.l.b16 %v556
      %v574 = vunpack.c.h.b16 %v556
      %v575 = vunpack.c.l.b16 %v557
      %v576 = vunpack.c.h.b16 %v557
      %v577 = vunpack.c.l.b16 %v558
      %v578 = vunpack.c.h.b16 %v558
      %v579 = vunpack.c.l.b16 %v559
      %v580 = vunpack.c.h.b16 %v559
      %v581 = vunpack.c.l.b16 %v560
      %v582 = vunpack.c.h.b16 %v560
      %v583 = vunpack.c.l.b16 %v561
      %v584 = vunpack.c.h.b16 %v561
      %v585 = vunpack.c.l.b16 %v562
      %v586 = vunpack.c.h.b16 %v562
      %v587 = vpack.c.b16 %v571, %v571
      %v588 = vpack.c.b16 %v572, %v572
      %v589 = vpack.c.b16 %v573, %v573
      %v590 = vpack.c.b16 %v574, %v574
      %v591 = vpack.c.b16 %v575, %v575
      %v592 = vpack.c.b16 %v576, %v576
      %v593 = vpack.c.b16 %v577, %v577
      %v594 = vpack.c.b16 %v578, %v578
      %v595 = vpack.c.b16 %v579, %v579
      %v596 = vpack.c.b16 %v580, %v580
      %v597 = vpack.c.b16 %v581, %v581
      %v598 = vpack.c.b16 %v582, %v582
      %v599 = vpack.c.b16 %v583, %v583
      %v600 = vpack.c.b16 %v584, %v584
      %v601 = vpack.c.b16 %v585, %v585
      %v602 = vpack.c.b16 %v586, %v586
      %vm619 = vcmask 142336
      %620 = vst.msk [vmem:[%s214] sm:$0xf] %vm619, %v587
      %621 = vst.msk [vmem:[%s214 + $0x4] sm:$0xf] %vm619, %v588
      %622 = vst.msk [vmem:[%s214 + $0x8] sm:$0xf] %vm619, %v589
      %623 = vst.msk [vmem:[%s214 + $0xc] sm:$0xf] %vm619, %v590
      %624 = vst.msk [vmem:[%s214 + $0x10] sm:$0xf] %vm619, %v591
      %625 = vst.msk [vmem:[%s214 + $0x14] sm:$0xf] %vm619, %v592
      %626 = vst.msk [vmem:[%s214 + $0x18] sm:$0xf] %vm619, %v593
      %627 = vst.msk [vmem:[%s214 + $0x1c] sm:$0xf] %vm619, %v594
      %628 = vst.msk [vmem:[%s214 + $0x20] sm:$0xf] %vm619, %v595
      %629 = vst.msk [vmem:[%s214 + $0x24] sm:$0xf] %vm619, %v596
      %630 = vst.msk [vmem:[%s214 + $0x28] sm:$0xf] %vm619, %v597
      %631 = vst.msk [vmem:[%s214 + $0x2c] sm:$0xf] %vm619, %v598
      %632 = vst.msk [vmem:[%s214 + $0x30] sm:$0xf] %vm619, %v599
      %633 = vst.msk [vmem:[%s214 + $0x34] sm:$0xf] %vm619, %v600
      %634 = vst.msk [vmem:[%s214 + $0x38] sm:$0xf] %vm619, %v601
      %635 = vst.msk [vmem:[%s214 + $0x3c] sm:$0xf] %vm619, %v602
      %636 = vrot.lane.b32.xlu0 %v362, 112
      %v637 = vpop.permute.xlu0 %636
      %638 = vrot.lane.b32.xlu0 %v367, 112
      %v639 = vpop.permute.xlu0 %638
      %640 = vrot.lane.b32.xlu0 %v372, 112
      %v641 = vpop.permute.xlu0 %640
      %642 = vrot.lane.b32.xlu0 %v377, 112
      %v643 = vpop.permute.xlu0 %642
      %644 = vrot.lane.b32.xlu0 %v382, 112
      %v645 = vpop.permute.xlu0 %644
      %646 = vrot.lane.b32.xlu0 %v387, 112
      %v647 = vpop.permute.xlu0 %646
      %648 = vrot.lane.b32.xlu0 %v392, 112
      %v649 = vpop.permute.xlu0 %648
      %650 = vrot.lane.b32.xlu0 %v397, 112
      %v651 = vpop.permute.xlu0 %650
      %652 = vrot.lane.b32.xlu0 %v402, 112
      %v653 = vpop.permute.xlu0 %652
      %654 = vrot.lane.b32.xlu0 %v407, 112
      %v655 = vpop.permute.xlu0 %654
      %656 = vrot.lane.b32.xlu0 %v412, 112
      %v657 = vpop.permute.xlu0 %656
      %658 = vrot.lane.b32.xlu0 %v417, 112
      %v659 = vpop.permute.xlu0 %658
      %660 = vrot.lane.b32.xlu0 %v422, 112
      %v661 = vpop.permute.xlu0 %660
      %662 = vrot.lane.b32.xlu0 %v427, 112
      %v663 = vpop.permute.xlu0 %662
      %664 = vrot.lane.b32.xlu0 %v432, 112
      %v665 = vpop.permute.xlu0 %664
      %666 = vrot.lane.b32.xlu0 %v437, 112
      %v667 = vpop.permute.xlu0 %666
      %vm684 = vcmask 15360
      %685 = vst.msk [vmem:[%s220] sm:$0xff] %vm684, %v637
      %686 = vst.msk [vmem:[%s220 + $0x8] sm:$0xff] %vm684, %v639
      %687 = vst.msk [vmem:[%s220 + $0x10] sm:$0xff] %vm684, %v641
      %688 = vst.msk [vmem:[%s220 + $0x18] sm:$0xff] %vm684, %v643
      %689 = vst.msk [vmem:[%s220 + $0x20] sm:$0xff] %vm684, %v645
      %690 = vst.msk [vmem:[%s220 + $0x28] sm:$0xff] %vm684, %v647
      %691 = vst.msk [vmem:[%s220 + $0x30] sm:$0xff] %vm684, %v649
      %692 = vst.msk [vmem:[%s220 + $0x38] sm:$0xff] %vm684, %v651
      %693 = vst.msk [vmem:[%s220 + $0x40] sm:$0xff] %vm684, %v653
      %694 = vst.msk [vmem:[%s220 + $0x48] sm:$0xff] %vm684, %v655
      %695 = vst.msk [vmem:[%s220 + $0x50] sm:$0xff] %vm684, %v657
      %696 = vst.msk [vmem:[%s220 + $0x58] sm:$0xff] %vm684, %v659
      %697 = vst.msk [vmem:[%s220 + $0x60] sm:$0xff] %vm684, %v661
      %698 = vst.msk [vmem:[%s220 + $0x68] sm:$0xff] %vm684, %v663
      %699 = vst.msk [vmem:[%s220 + $0x70] sm:$0xff] %vm684, %v665
      %700 = vst.msk [vmem:[%s220 + $0x78] sm:$0xff] %vm684, %v667
      %701 = vrot.lane.b32.xlu0 %v362, 110
      %v702 = vpop.permute.xlu0 %701
      %703 = vrot.lane.b32.xlu0 %v367, 110
      %v704 = vpop.permute.xlu0 %703
      %705 = vrot.lane.b32.xlu0 %v372, 110
      %v706 = vpop.permute.xlu0 %705
      %707 = vrot.lane.b32.xlu0 %v377, 110
      %v708 = vpop.permute.xlu0 %707
      %709 = vrot.lane.b32.xlu0 %v382, 110
      %v710 = vpop.permute.xlu0 %709
      %711 = vrot.lane.b32.xlu0 %v387, 110
      %v712 = vpop.permute.xlu0 %711
      %713 = vrot.lane.b32.xlu0 %v392, 110
      %v714 = vpop.permute.xlu0 %713
      %715 = vrot.lane.b32.xlu0 %v397, 110
      %v716 = vpop.permute.xlu0 %715
      %717 = vrot.lane.b32.xlu0 %v402, 110
      %v718 = vpop.permute.xlu0 %717
      %719 = vrot.lane.b32.xlu0 %v407, 110
      %v720 = vpop.permute.xlu0 %719
      %721 = vrot.lane.b32.xlu0 %v412, 110
      %v722 = vpop.permute.xlu0 %721
      %723 = vrot.lane.b32.xlu0 %v417, 110
      %v724 = vpop.permute.xlu0 %723
      %725 = vrot.lane.b32.xlu0 %v422, 110
      %v726 = vpop.permute.xlu0 %725
      %727 = vrot.lane.b32.xlu0 %v427, 110
      %v728 = vpop.permute.xlu0 %727
      %729 = vrot.lane.b32.xlu0 %v432, 110
      %v730 = vpop.permute.xlu0 %729
      %731 = vrot.lane.b32.xlu0 %v437, 110
      %v732 = vpop.permute.xlu0 %731
      %749 = vst.msk [vmem:[%s226] sm:$0xff] %vm684, %v702
      %750 = vst.msk [vmem:[%s226 + $0x8] sm:$0xff] %vm684, %v704
      %751 = vst.msk [vmem:[%s226 + $0x10] sm:$0xff] %vm684, %v706
      %752 = vst.msk [vmem:[%s226 + $0x18] sm:$0xff] %vm684, %v708
      %753 = vst.msk [vmem:[%s226 + $0x20] sm:$0xff] %vm684, %v710
      %754 = vst.msk [vmem:[%s226 + $0x28] sm:$0xff] %vm684, %v712
      %755 = vst.msk [vmem:[%s226 + $0x30] sm:$0xff] %vm684, %v714
      %756 = vst.msk [vmem:[%s226 + $0x38] sm:$0xff] %vm684, %v716
      %757 = vst.msk [vmem:[%s226 + $0x40] sm:$0xff] %vm684, %v718
      %758 = vst.msk [vmem:[%s226 + $0x48] sm:$0xff] %vm684, %v720
      %759 = vst.msk [vmem:[%s226 + $0x50] sm:$0xff] %vm684, %v722
      %760 = vst.msk [vmem:[%s226 + $0x58] sm:$0xff] %vm684, %v724
      %761 = vst.msk [vmem:[%s226 + $0x60] sm:$0xff] %vm684, %v726
      %762 = vst.msk [vmem:[%s226 + $0x68] sm:$0xff] %vm684, %v728
      %763 = vst.msk [vmem:[%s226 + $0x70] sm:$0xff] %vm684, %v730
      %764 = vst.msk [vmem:[%s226 + $0x78] sm:$0xff] %vm684, %v732
      %s765 = smul.u32 16, %s16
      %p766 = scmp.lt.s32.totalorder %s765, 31
      %s767 = scalar_select %p766, %s765, 31
      %s768 = smul.addr %s767, 4
      %s769 = scalar_lea.vmem %s2, %s768
      %s770 = smul.u32 16, %s16
      %p771 = scmp.lt.s32.totalorder %s770, 31
      %s772 = scalar_select %p771, %s770, 31
      %s773 = smul.addr %s772, 8
      %s774 = scalar_lea.vmem %s3, %s773
      %s775 = smul.u32 16, %s16
      %p776 = scmp.lt.s32.totalorder %s775, 31
      %s777 = scalar_select %p776, %s775, 31
      %s778 = smul.addr %s777, 8
      %s779 = scalar_lea.vmem %s4, %s778
      // Predicated region
      $region29: #{tpu_custom_call.1} parent=27 // pred_check
        %p780 = pneg %p81
      $region30: #{tpu_custom_call.1} parent=27 // pred_check_branch
        %782 = sbr.rel (%p780) target = $region32
      $region31: #{tpu_custom_call.1} parent=27 // pred_region
        %s783 = smul.u32 16, %s16
      $region32: #{tpu_custom_call.1} parent=27 // pred_fallthru
        _
      // Predicated region
      $region33: #{tpu_custom_call.1} parent=27 // pred_check
        %p784 = pneg %p107
      $region34: #{tpu_custom_call.1} parent=27 // pred_check_branch
        %786 = sbr.rel (%p784) target = $region36
      $region35: #{tpu_custom_call.1} parent=27 // pred_region
        %s787 = smul.u32 16, %s16
      $region36: #{tpu_custom_call.1} parent=27 // pred_fallthru
        _
      // Predicated region
      $region37: #{tpu_custom_call.1} parent=27 // pred_check
        %p788 = pneg %p133
      $region38: #{tpu_custom_call.1} parent=27 // pred_check_branch
        %790 = sbr.rel (%p788) target = $region40
      $region39: #{tpu_custom_call.1} parent=27 // pred_region
        %s791 = smul.u32 16, %s16
      $region40: #{tpu_custom_call.1} parent=27 // pred_fallthru
        _
    $region28: #{tpu_custom_call.1} parent=5 // pred_fallthru
      _
    %p792 = scmp.le.s32.totalorder 2, %s11
    // Predicated region
    $region41: #{tpu_custom_call.1} parent=5 // pred_check
      %p793 = pneg %p792
    $region42: #{tpu_custom_call.1} parent=5 // pred_check_branch
      %795 = sbr.rel (%p793) target = $region44
    $region43: #{tpu_custom_call.1} parent=5 // pred_region
      %s796 = ssub.s32 %s11, 2
      // Predicated region
      $region45: #{tpu_custom_call.1} parent=43 // pred_check
        %p797 = pneg %p87
      $region46: #{tpu_custom_call.1} parent=43 // pred_check_branch
        %799 = sbr.rel (%p797) target = $region48
      $region47: #{tpu_custom_call.1} parent=43 // pred_region
        %s800 = smul.u32 16, %s17
        %p801 = scmp.lt.s32.totalorder %s800, 31
        %s802 = scalar_select %p801, %s800, 31
        %s803 = smul.addr %s802, 4
        %s804 = scalar_lea.vmem %s2, %s803
      $region48: #{tpu_custom_call.1} parent=43 // pred_fallthru
        _
      // Predicated region
      $region49: #{tpu_custom_call.1} parent=43 // pred_check
        %p805 = pneg %p113
      $region50: #{tpu_custom_call.1} parent=43 // pred_check_branch
        %807 = sbr.rel (%p805) target = $region52
      $region51: #{tpu_custom_call.1} parent=43 // pred_region
        %s808 = smul.u32 16, %s17
        %p809 = scmp.lt.s32.totalorder %s808, 31
        %s810 = scalar_select %p809, %s808, 31
        %s811 = smul.addr %s810, 8
        %s812 = scalar_lea.vmem %s3, %s811
      $region52: #{tpu_custom_call.1} parent=43 // pred_fallthru
        _
      // Predicated region
      $region53: #{tpu_custom_call.1} parent=43 // pred_check
        %p813 = pneg %p139
      $region54: #{tpu_custom_call.1} parent=43 // pred_check_branch
        %815 = sbr.rel (%p813) target = $region56
      $region55: #{tpu_custom_call.1} parent=43 // pred_region
        %s816 = smul.u32 16, %s17
        %p817 = scmp.lt.s32.totalorder %s816, 31
        %s818 = scalar_select %p817, %s816, 31
        %s819 = smul.addr %s818, 8
        %s820 = scalar_lea.vmem %s4, %s819
      $region56: #{tpu_custom_call.1} parent=43 // pred_fallthru
        _
    $region44: #{tpu_custom_call.1} parent=5 // pred_fallthru
      _
  $region6: #{tpu_custom_call.1} parent=0 // loop_footer
    %s15 = sadd.s32 1, %s11
  $region7: #{tpu_custom_call.1} parent=0 // loop_footer_branch
    %10 = sbr.rel target = $region3
  $region8: #{tpu_custom_call.1} parent=0 // loop_exit
    _

</llo_original>
